<compile_context>
chip_gen: v6e
topology: v6e:2x2x1
jax: 0.10.0
libtpu: 0.0.40
codegen_flags: <defaults>
</compile_context>

<pallas_src>
import functools

import jax
import jax.numpy as jnp
from jax.experimental import pallas as pl
from jax.experimental.pallas import tpu as pltpu


def _log_sigmoid(x):
    # Numerically stable log(sigmoid(x)) = min(x, 0) - log1p(exp(-|x|)).
    # exp / log1p ride the otherwise-idle EUP slot.
    return jnp.minimum(x, 0.0) - jnp.log1p(jnp.exp(-jnp.abs(x)))


def _nce_tile_kernel(c_ref, o_ref, negf_ref, out_ref, *, total_b, tile_b, k, h):
    """One batch tile; negf_ref is the lane-folded (tile_b, k*h) negatives."""
    i = pl.program_id(0)

    c32 = c_ref[...].astype(jnp.float32)                 # (tile_b, h)
    o32 = o_ref[...].astype(jnp.float32)                 # (tile_b, h)

    # Positive term: batched dot over the hidden dim -> (tile_b, 1).
    pos_score = jnp.sum(c32 * o32, axis=-1, keepdims=True)
    per_example = _log_sigmoid(pos_score)

    # Negative terms: static lane slices of the folded block keep every f32
    # intermediate at (tile_b, h) size instead of (tile_b, k, h).
    # TODO(synk): for large k, do this as one block-diagonal 0/1 matmul on MXU.
    for kk in range(k):
        nk = negf_ref[:, kk * h:(kk + 1) * h].astype(jnp.float32)  # (tile_b, h)
        s = jnp.sum(nk * c32, axis=-1, keepdims=True)              # (tile_b, 1)
        per_example = per_example + _log_sigmoid(-s)

    # Mask rows past the true batch size (remainder tile reads padded garbage;
    # where() after the nonlinearity is NaN/Inf-safe).
    row = (jax.lax.broadcasted_iota(jnp.int32, per_example.shape, 0)
           + i * tile_b)
    per_example = jnp.where(row < total_b, per_example, 0.0)

    # One partial sum per grid step, stored as an unmasked lane-dense slab.
    partial = jnp.sum(per_example, keepdims=True)         # (1, 1)
    out_ref[...] = jnp.broadcast_to(partial, out_ref.shape)


def _round_up(x, m):
    return ((x + m - 1) // m) * m


def _lane_pad(n):
    return _round_up(max(n, 1), 128)


def _vmem_capacity_bytes():
    """Physical VMEM per core; conservative (v7x-sized) fallback."""
    try:
        info = pltpu.get_tpu_info()
        cap = getattr(info, "vmem_capacity_bytes", None)
        if cap:
            return int(cap)
    except Exception:
        pass
    return 64 << 20


def _per_row_vmem_bytes(k, h, itemsize):
    """VMEM bytes one batch row costs: double-buffered lane-padded input tiles
    plus the in-kernel f32 temporaries (c32/o32, per-k slice + product, acc)."""
    kh_pad = _lane_pad(k * h)       # folded negatives row (lane-dense for h<128)
    h_pad = _lane_pad(h)            # c / o rows pad to 128 lanes when h < 128
    inputs = 2 * (kh_pad + 2 * h_pad) * itemsize     # 2x: double buffering
    f32_tmp = 6 * h_pad * 4
    return inputs + f32_tmp


def _choose_tile_b(b, per_row_bytes, budget_bytes, align):
    tb = max(align, (budget_bytes // per_row_bytes) // align * align)
    if b > align:
        # Keep at least two grid steps when the batch allows it: megacore
        # sharding on v7x and DMA/compute pipelining on every generation.
        tb = min(tb, _round_up((b + 1) // 2, align))
    if tb >= b:
        tb = b          # block dim == full array dim is always a legal block
    return tb


def nce_loss(c_emb, o_emb, negatives, *, tile_b=None):
    """c_emb: (b, h), o_emb: (b, h), negatives: (b, k, h) -> scalar f32 loss."""
    b, h = c_emb.shape
    _, k, _ = negatives.shape
    assert o_emb.shape == (b, h) and negatives.shape == (b, k, h)

    itemsize = jnp.dtype(negatives.dtype).itemsize
    # Sublane packing of the input dtype: 8 rows f32, 16 bf16, 32 int8/fp8.
    align = max(8, 32 // itemsize)

    capacity = _vmem_capacity_bytes()
    # ~40% of physical VMEM as the double-buffered working-set budget:
    # ~51 MiB on v5e/v6e (128 MiB physical), ~25 MiB on v7x (64 MiB physical).
    budget = max(16 << 20, int(capacity * 0.4))

    per_row = _per_row_vmem_bytes(k, h, itemsize)
    if tile_b is None:
        tile_b = _choose_tile_b(b, per_row, budget, align)
    num_tiles = pl.cdiv(b, tile_b)

    # Explicit scoped-VMEM limit: tile working set (inputs, f32 temporaries,
    # output slabs) + slack, capped well below physical VMEM (v7x headroom).
    working = tile_b * per_row + 2 * (8 * 128 * 4)
    vmem_limit = int(min(max(working + (8 << 20), 32 << 20),
                         max(32 << 20, capacity - (16 << 20))))

    # Lane-fold (k, h): free reshape of a contiguous array, makes the
    # negatives DMA and VMEM tile lane-dense even for small h.
    neg_flat = negatives.reshape(b, k * h)

    kernel = functools.partial(
        _nce_tile_kernel, total_b=b, tile_b=tile_b, k=k, h=h)

    partials = pl.pallas_call(
        kernel,
        out_shape=jax.ShapeDtypeStruct((num_tiles * 8, 128), jnp.float32),
        grid=(num_tiles,),
        in_specs=[
            pl.BlockSpec((tile_b, h), lambda i: (i, 0)),
            pl.BlockSpec((tile_b, h), lambda i: (i, 0)),
            pl.BlockSpec((tile_b, k * h), lambda i: (i, 0)),
        ],
        out_specs=pl.BlockSpec((8, 128), lambda i: (i, 0)),
        compiler_params=pltpu.CompilerParams(
            dimension_semantics=("parallel",),
            vmem_limit_bytes=vmem_limit,
        ),
    )(c_emb, o_emb, neg_flat)

    # One meaningful value per grid step at [tile*8, 0]; mean over the true b.
    per_tile = partials.reshape(num_tiles, 8, 128)[:, 0, 0]
    return -(jnp.sum(per_tile) / jnp.float32(b))


def _reference(c_emb, o_emb, negatives):
    c = c_emb.astype(jnp.float32)
    o = o_emb.astype(jnp.float32)
    n = negatives.astype(jnp.float32)
    pos = jax.nn.log_sigmoid(jnp.sum(c * o, axis=-1))
    negs = jnp.sum(
        jax.nn.log_sigmoid(-jnp.einsum("bkh,bh->bk", n, c)), axis=1)
    return -jnp.mean(pos + negs)


if __name__ == "__main__":
    # Small shapes consistent with the module's forward.
    b, k, h = 8, 8, 32
    kc, ko, kn = jax.random.split(jax.random.PRNGKey(0), 3)
    c_emb = jax.random.normal(kc, (b, h), dtype=jnp.float32)
    o_emb = jax.random.normal(ko, (b, h), dtype=jnp.float32)
    negatives = jax.random.normal(kn, (b, k, h), dtype=jnp.float32)

    loss = jax.block_until_ready(nce_loss(c_emb, o_emb, negatives))
    ref = jax.block_until_ready(_reference(c_emb, o_emb, negatives))
    assert jnp.allclose(loss, ref, rtol=1e-5, atol=1e-5), (loss, ref)

    # Larger batch with a forced small tile: multi-step grid, pipelined DMA,
    # remainder-row masking (200 % 64 != 0).
    b2, k2, h2 = 200, 8, 32
    kc2, ko2, kn2 = jax.random.split(jax.random.PRNGKey(1), 3)
    c2 = jax.random.normal(kc2, (b2, h2), dtype=jnp.float32)
    o2 = jax.random.normal(ko2, (b2, h2), dtype=jnp.float32)
    n2 = jax.random.normal(kn2, (b2, k2, h2), dtype=jnp.float32)

    loss2 = jax.block_until_ready(nce_loss(c2, o2, n2, tile_b=64))
    ref2 = jax.block_until_ready(_reference(c2, o2, n2))
    assert jnp.allclose(loss2, ref2, rtol=1e-5, atol=1e-4), (loss2, ref2)

    # bf16 inputs (the recommended caller-side lever: halves HBM bytes) with
    # auto-chosen tiling; exercises the 16-row sublane alignment and the
    # fused per-slice f32 cast.
    c3 = c2.astype(jnp.bfloat16)
    o3 = o2.astype(jnp.bfloat16)
    n3 = n2.astype(jnp.bfloat16)
    loss3 = jax.block_until_ready(nce_loss(c3, o3, n3))
    ref3 = jax.block_until_ready(_reference(c3, o3, n3))
    assert jnp.allclose(loss3, ref3, rtol=1e-4, atol=1e-4), (loss3, ref3)

    print("KERNEL_OK")
</pallas_src>

<mosaic_0001>
module attributes {stable_mosaic.version = 11 : i64} {
  func.func @_nce_tile_kernel(%arg0: i32, %arg1: memref<8x32xf32, #tpu.memory_space<vmem>>, %arg2: memref<8x32xf32, #tpu.memory_space<vmem>>, %arg3: memref<8x256xf32, #tpu.memory_space<vmem>>, %arg4: memref<8x128xf32, #tpu.memory_space<vmem>>) attributes {dimension_semantics = [#tpu.dimension_semantics<parallel>], iteration_bounds = array<i64: 1>, scalar_prefetch = 0 : i64, scratch_operands = 0 : i64, tpu.core_type = #tpu.core_type<tc>, window_params = [{transform_indices = @transform_0, window_bounds = array<i64: 8, 32>}, {transform_indices = @transform_1, window_bounds = array<i64: 8, 32>}, {transform_indices = @transform_2, window_bounds = array<i64: 8, 256>}, {transform_indices = @transform_3, window_bounds = array<i64: 8, 128>}]} {
    %c0 = arith.constant 0 : index
    %c0_0 = arith.constant 0 : index
    %0 = vector.load %arg1[%c0, %c0_0] : memref<8x32xf32, #tpu.memory_space<vmem>>, vector<8x32xf32>
    %c0_1 = arith.constant 0 : index
    %c0_2 = arith.constant 0 : index
    %1 = vector.load %arg2[%c0_1, %c0_2] : memref<8x32xf32, #tpu.memory_space<vmem>>, vector<8x32xf32>
    %2 = arith.mulf %0, %1 : vector<8x32xf32>
    %cst = arith.constant dense<0.000000e+00> : vector<8xf32>
    %3 = vector.multi_reduction <add>, %2, %cst [1] : vector<8x32xf32> to vector<8xf32>
    %4 = vector.shape_cast %3 : vector<8xf32> to vector<8x1xf32>
    %cst_3 = arith.constant 0.000000e+00 : f32
    %5 = vector.broadcast %cst_3 : f32 to vector<8x1xf32>
    %6 = arith.minimumf %4, %5 : vector<8x1xf32>
    %7 = math.absf %4 : vector<8x1xf32>
    %cst_4 = arith.constant 0.000000e+00 : f32
    %8 = vector.broadcast %cst_4 : f32 to vector<8x1xf32>
    %9 = arith.subf %8, %7 : vector<8x1xf32>
    %10 = math.exp %9 : vector<8x1xf32>
    %11 = math.log1p %10 : vector<8x1xf32>
    %12 = arith.subf %6, %11 : vector<8x1xf32>
    %c0_5 = arith.constant 0 : index
    %c0_6 = arith.constant 0 : index
    %13 = vector.load %arg3[%c0_5, %c0_6] : memref<8x256xf32, #tpu.memory_space<vmem>>, vector<8x32xf32>
    %14 = arith.mulf %13, %0 : vector<8x32xf32>
    %cst_7 = arith.constant dense<0.000000e+00> : vector<8xf32>
    %15 = vector.multi_reduction <add>, %14, %cst_7 [1] : vector<8x32xf32> to vector<8xf32>
    %16 = vector.shape_cast %15 : vector<8xf32> to vector<8x1xf32>
    %cst_8 = arith.constant 0.000000e+00 : f32
    %17 = vector.broadcast %cst_8 : f32 to vector<8x1xf32>
    %18 = arith.subf %17, %16 : vector<8x1xf32>
    %cst_9 = arith.constant 0.000000e+00 : f32
    %19 = vector.broadcast %cst_9 : f32 to vector<8x1xf32>
    %20 = arith.minimumf %18, %19 : vector<8x1xf32>
    %21 = math.absf %18 : vector<8x1xf32>
    %cst_10 = arith.constant 0.000000e+00 : f32
    %22 = vector.broadcast %cst_10 : f32 to vector<8x1xf32>
    %23 = arith.subf %22, %21 : vector<8x1xf32>
    %24 = math.exp %23 : vector<8x1xf32>
    %25 = math.log1p %24 : vector<8x1xf32>
    %26 = arith.subf %20, %25 : vector<8x1xf32>
    %27 = arith.addf %12, %26 : vector<8x1xf32>
    %c0_11 = arith.constant 0 : index
    %c32 = arith.constant 32 : index
    %28 = vector.load %arg3[%c0_11, %c32] : memref<8x256xf32, #tpu.memory_space<vmem>>, vector<8x32xf32>
    %29 = arith.mulf %28, %0 : vector<8x32xf32>
    %cst_12 = arith.constant dense<0.000000e+00> : vector<8xf32>
    %30 = vector.multi_reduction <add>, %29, %cst_12 [1] : vector<8x32xf32> to vector<8xf32>
    %31 = vector.shape_cast %30 : vector<8xf32> to vector<8x1xf32>
    %cst_13 = arith.constant 0.000000e+00 : f32
    %32 = vector.broadcast %cst_13 : f32 to vector<8x1xf32>
    %33 = arith.subf %32, %31 : vector<8x1xf32>
    %cst_14 = arith.constant 0.000000e+00 : f32
    %34 = vector.broadcast %cst_14 : f32 to vector<8x1xf32>
    %35 = arith.minimumf %33, %34 : vector<8x1xf32>
    %36 = math.absf %33 : vector<8x1xf32>
    %cst_15 = arith.constant 0.000000e+00 : f32
    %37 = vector.broadcast %cst_15 : f32 to vector<8x1xf32>
    %38 = arith.subf %37, %36 : vector<8x1xf32>
    %39 = math.exp %38 : vector<8x1xf32>
    %40 = math.log1p %39 : vector<8x1xf32>
    %41 = arith.subf %35, %40 : vector<8x1xf32>
    %42 = arith.addf %27, %41 : vector<8x1xf32>
    %c0_16 = arith.constant 0 : index
    %c64 = arith.constant 64 : index
    %43 = vector.load %arg3[%c0_16, %c64] : memref<8x256xf32, #tpu.memory_space<vmem>>, vector<8x32xf32>
    %44 = arith.mulf %43, %0 : vector<8x32xf32>
    %cst_17 = arith.constant dense<0.000000e+00> : vector<8xf32>
    %45 = vector.multi_reduction <add>, %44, %cst_17 [1] : vector<8x32xf32> to vector<8xf32>
    %46 = vector.shape_cast %45 : vector<8xf32> to vector<8x1xf32>
    %cst_18 = arith.constant 0.000000e+00 : f32
    %47 = vector.broadcast %cst_18 : f32 to vector<8x1xf32>
    %48 = arith.subf %47, %46 : vector<8x1xf32>
    %cst_19 = arith.constant 0.000000e+00 : f32
    %49 = vector.broadcast %cst_19 : f32 to vector<8x1xf32>
    %50 = arith.minimumf %48, %49 : vector<8x1xf32>
    %51 = math.absf %48 : vector<8x1xf32>
    %cst_20 = arith.constant 0.000000e+00 : f32
    %52 = vector.broadcast %cst_20 : f32 to vector<8x1xf32>
    %53 = arith.subf %52, %51 : vector<8x1xf32>
    %54 = math.exp %53 : vector<8x1xf32>
    %55 = math.log1p %54 : vector<8x1xf32>
    %56 = arith.subf %50, %55 : vector<8x1xf32>
    %57 = arith.addf %42, %56 : vector<8x1xf32>
    %c0_21 = arith.constant 0 : index
    %c96 = arith.constant 96 : index
    %58 = vector.load %arg3[%c0_21, %c96] : memref<8x256xf32, #tpu.memory_space<vmem>>, vector<8x32xf32>
    %59 = arith.mulf %58, %0 : vector<8x32xf32>
    %cst_22 = arith.constant dense<0.000000e+00> : vector<8xf32>
    %60 = vector.multi_reduction <add>, %59, %cst_22 [1] : vector<8x32xf32> to vector<8xf32>
    %61 = vector.shape_cast %60 : vector<8xf32> to vector<8x1xf32>
    %cst_23 = arith.constant 0.000000e+00 : f32
    %62 = vector.broadcast %cst_23 : f32 to vector<8x1xf32>
    %63 = arith.subf %62, %61 : vector<8x1xf32>
    %cst_24 = arith.constant 0.000000e+00 : f32
    %64 = vector.broadcast %cst_24 : f32 to vector<8x1xf32>
    %65 = arith.minimumf %63, %64 : vector<8x1xf32>
    %66 = math.absf %63 : vector<8x1xf32>
    %cst_25 = arith.constant 0.000000e+00 : f32
    %67 = vector.broadcast %cst_25 : f32 to vector<8x1xf32>
    %68 = arith.subf %67, %66 : vector<8x1xf32>
    %69 = math.exp %68 : vector<8x1xf32>
    %70 = math.log1p %69 : vector<8x1xf32>
    %71 = arith.subf %65, %70 : vector<8x1xf32>
    %72 = arith.addf %57, %71 : vector<8x1xf32>
    %c0_26 = arith.constant 0 : index
    %c128 = arith.constant 128 : index
    %73 = vector.load %arg3[%c0_26, %c128] : memref<8x256xf32, #tpu.memory_space<vmem>>, vector<8x32xf32>
    %74 = arith.mulf %73, %0 : vector<8x32xf32>
    %cst_27 = arith.constant dense<0.000000e+00> : vector<8xf32>
    %75 = vector.multi_reduction <add>, %74, %cst_27 [1] : vector<8x32xf32> to vector<8xf32>
    %76 = vector.shape_cast %75 : vector<8xf32> to vector<8x1xf32>
    %cst_28 = arith.constant 0.000000e+00 : f32
    %77 = vector.broadcast %cst_28 : f32 to vector<8x1xf32>
    %78 = arith.subf %77, %76 : vector<8x1xf32>
    %cst_29 = arith.constant 0.000000e+00 : f32
    %79 = vector.broadcast %cst_29 : f32 to vector<8x1xf32>
    %80 = arith.minimumf %78, %79 : vector<8x1xf32>
    %81 = math.absf %78 : vector<8x1xf32>
    %cst_30 = arith.constant 0.000000e+00 : f32
    %82 = vector.broadcast %cst_30 : f32 to vector<8x1xf32>
    %83 = arith.subf %82, %81 : vector<8x1xf32>
    %84 = math.exp %83 : vector<8x1xf32>
    %85 = math.log1p %84 : vector<8x1xf32>
    %86 = arith.subf %80, %85 : vector<8x1xf32>
    %87 = arith.addf %72, %86 : vector<8x1xf32>
    %c0_31 = arith.constant 0 : index
    %c160 = arith.constant 160 : index
    %88 = vector.load %arg3[%c0_31, %c160] : memref<8x256xf32, #tpu.memory_space<vmem>>, vector<8x32xf32>
    %89 = arith.mulf %88, %0 : vector<8x32xf32>
    %cst_32 = arith.constant dense<0.000000e+00> : vector<8xf32>
    %90 = vector.multi_reduction <add>, %89, %cst_32 [1] : vector<8x32xf32> to vector<8xf32>
    %91 = vector.shape_cast %90 : vector<8xf32> to vector<8x1xf32>
    %cst_33 = arith.constant 0.000000e+00 : f32
    %92 = vector.broadcast %cst_33 : f32 to vector<8x1xf32>
    %93 = arith.subf %92, %91 : vector<8x1xf32>
    %cst_34 = arith.constant 0.000000e+00 : f32
    %94 = vector.broadcast %cst_34 : f32 to vector<8x1xf32>
    %95 = arith.minimumf %93, %94 : vector<8x1xf32>
    %96 = math.absf %93 : vector<8x1xf32>
    %cst_35 = arith.constant 0.000000e+00 : f32
    %97 = vector.broadcast %cst_35 : f32 to vector<8x1xf32>
    %98 = arith.subf %97, %96 : vector<8x1xf32>
    %99 = math.exp %98 : vector<8x1xf32>
    %100 = math.log1p %99 : vector<8x1xf32>
    %101 = arith.subf %95, %100 : vector<8x1xf32>
    %102 = arith.addf %87, %101 : vector<8x1xf32>
    %c0_36 = arith.constant 0 : index
    %c192 = arith.constant 192 : index
    %103 = vector.load %arg3[%c0_36, %c192] : memref<8x256xf32, #tpu.memory_space<vmem>>, vector<8x32xf32>
    %104 = arith.mulf %103, %0 : vector<8x32xf32>
    %cst_37 = arith.constant dense<0.000000e+00> : vector<8xf32>
    %105 = vector.multi_reduction <add>, %104, %cst_37 [1] : vector<8x32xf32> to vector<8xf32>
    %106 = vector.shape_cast %105 : vector<8xf32> to vector<8x1xf32>
    %cst_38 = arith.constant 0.000000e+00 : f32
    %107 = vector.broadcast %cst_38 : f32 to vector<8x1xf32>
    %108 = arith.subf %107, %106 : vector<8x1xf32>
    %cst_39 = arith.constant 0.000000e+00 : f32
    %109 = vector.broadcast %cst_39 : f32 to vector<8x1xf32>
    %110 = arith.minimumf %108, %109 : vector<8x1xf32>
    %111 = math.absf %108 : vector<8x1xf32>
    %cst_40 = arith.constant 0.000000e+00 : f32
    %112 = vector.broadcast %cst_40 : f32 to vector<8x1xf32>
    %113 = arith.subf %112, %111 : vector<8x1xf32>
    %114 = math.exp %113 : vector<8x1xf32>
    %115 = math.log1p %114 : vector<8x1xf32>
    %116 = arith.subf %110, %115 : vector<8x1xf32>
    %117 = arith.addf %102, %116 : vector<8x1xf32>
    %c0_41 = arith.constant 0 : index
    %c224 = arith.constant 224 : index
    %118 = vector.load %arg3[%c0_41, %c224] : memref<8x256xf32, #tpu.memory_space<vmem>>, vector<8x32xf32>
    %119 = arith.mulf %118, %0 : vector<8x32xf32>
    %cst_42 = arith.constant dense<0.000000e+00> : vector<8xf32>
    %120 = vector.multi_reduction <add>, %119, %cst_42 [1] : vector<8x32xf32> to vector<8xf32>
    %121 = vector.shape_cast %120 : vector<8xf32> to vector<8x1xf32>
    %cst_43 = arith.constant 0.000000e+00 : f32
    %122 = vector.broadcast %cst_43 : f32 to vector<8x1xf32>
    %123 = arith.subf %122, %121 : vector<8x1xf32>
    %cst_44 = arith.constant 0.000000e+00 : f32
    %124 = vector.broadcast %cst_44 : f32 to vector<8x1xf32>
    %125 = arith.minimumf %123, %124 : vector<8x1xf32>
    %126 = math.absf %123 : vector<8x1xf32>
    %cst_45 = arith.constant 0.000000e+00 : f32
    %127 = vector.broadcast %cst_45 : f32 to vector<8x1xf32>
    %128 = arith.subf %127, %126 : vector<8x1xf32>
    %129 = math.exp %128 : vector<8x1xf32>
    %130 = math.log1p %129 : vector<8x1xf32>
    %131 = arith.subf %125, %130 : vector<8x1xf32>
    %132 = arith.addf %117, %131 : vector<8x1xf32>
    %133 = tpu.iota {dimensions = array<i32: 0>} : vector<8x1xi32>
    %c8_i32 = arith.constant 8 : i32
    %134 = arith.muli %arg0, %c8_i32 : i32
    %135 = vector.broadcast %134 : i32 to vector<8x1xi32>
    %136 = arith.addi %133, %135 : vector<8x1xi32>
    %c8_i32_46 = arith.constant 8 : i32
    %137 = vector.broadcast %c8_i32_46 : i32 to vector<8x1xi32>
    %138 = arith.cmpi slt, %136, %137 : vector<8x1xi32>
    %cst_47 = arith.constant 0.000000e+00 : f32
    %139 = vector.broadcast %cst_47 : f32 to vector<8x1xf32>
    %140 = arith.select %138, %132, %139 : vector<8x1xi1>, vector<8x1xf32>
    %141 = vector.shape_cast %140 : vector<8x1xf32> to vector<1x8x1xf32>
    %cst_48 = arith.constant dense<0.000000e+00> : vector<1xf32>
    %142 = vector.multi_reduction <add>, %141, %cst_48 [1, 2] : vector<1x8x1xf32> to vector<1xf32>
    %143 = vector.shape_cast %142 : vector<1xf32> to vector<1x1x1xf32>
    %144 = vector.extract %143[0, 0, 0] : f32 from vector<1x1x1xf32>
    %145 = vector.broadcast %144 : f32 to vector<1x1xf32>
    %146 = vector.shape_cast %145 : vector<1x1xf32> to vector<1x1xf32>
    %147 = vector.broadcast %146 : vector<1x1xf32> to vector<8x128xf32>
    %c0_49 = arith.constant 0 : index
    %c0_50 = arith.constant 0 : index
    %148 = vector.load %arg4[%c0_49, %c0_50] : memref<8x128xf32, #tpu.memory_space<vmem>>, vector<8x128xf32>
    tpu.vector_store %arg4[%c0_49, %c0_50], %147 {strides = array<i32>} : memref<8x128xf32, #tpu.memory_space<vmem>>, vector<8x128xf32>,
    return
  }
  func.func @transform_0(%arg0: i32) -> (i32, i32) {
    %c0_i32 = arith.constant 0 : i32
    %c0_i32_0 = arith.constant 0 : i32
    return %arg0, %c0_i32 : i32, i32
  }
  func.func @transform_1(%arg0: i32) -> (i32, i32) {
    %c0_i32 = arith.constant 0 : i32
    %c0_i32_0 = arith.constant 0 : i32
    return %arg0, %c0_i32 : i32, i32
  }
  func.func @transform_2(%arg0: i32) -> (i32, i32) {
    %c0_i32 = arith.constant 0 : i32
    %c0_i32_0 = arith.constant 0 : i32
    return %arg0, %c0_i32 : i32, i32
  }
  func.func @transform_3(%arg0: i32) -> (i32, i32) {
    %c0_i32 = arith.constant 0 : i32
    %c0_i32_0 = arith.constant 0 : i32
    return %arg0, %c0_i32 : i32, i32
  }
}

</mosaic_0001>

<llo_original>
// kernel: tpu_custom_call.1
$region0: #{tpu_custom_call.1}
  #allocation0 [shape = 'u32[]', space=smem, size = 0x4, offset = 0x4, fixed_abs, tag = 'smem constant byte address 0x4 - core index']
  #allocation1 [shape = 'u32[144,128]{1,0:T(1,128)}', space=vmem, size = 0x12000, scoped, tag = 'internal scratch']
  %s0 = inlined_call_operand.hbm [shape: f32[8,32], index: 0, kind: input, shape index: {}]
  %s1 = inlined_call_operand.hbm [shape: f32[8,32], index: 1, kind: input, shape index: {}]
  %s2 = inlined_call_operand.hbm [shape: f32[8,256], index: 2, kind: input, shape index: {}]
  %s3 = inlined_call_operand.hbm [shape: f32[8,128], index: 3, kind: output, shape index: {}]
  %s4 = sld [smem:[#allocation0]]
  $region34: #{tpu_custom_call.1} parent=0
    _
  %s6 = ssub.s32 1, %s4
  %s7 = scalar_select 0, %s6, %s4
  $region1: #{tpu_custom_call.1} parent=0
    #allocation2 [shape = 'u8[4096]{0}', space=vmem, size = 0x1000, scoped, tag = 'input window, operand 0, single buffered']
    #allocation3 [shape = 's32[1]{0}', space=sflag, size = 0x4, scoped, tag = 'scoped memory for tpu_custom_call.1']
    #allocation4 [shape = 's32[1]{0}', space=sflag, size = 0x4, scoped, tag = 'scoped memory for tpu_custom_call.1']
    #allocation5 [shape = 'u8[4096]{0}', space=vmem, size = 0x1000, scoped, tag = 'input window, operand 1, single buffered']
    #allocation6 [shape = 's32[1]{0}', space=sflag, size = 0x4, scoped, tag = 'scoped memory for tpu_custom_call.1']
    #allocation7 [shape = 'u8[8192]{0}', space=vmem, size = 0x2000, scoped, tag = 'input window, operand 2, single buffered']
    #allocation8 [shape = 'u8[4096]{0}', space=vmem, size = 0x1000, scoped, tag = 'output window, operand 0, single buffered']
    %8 = vsyncpa [#allocation3], 0
    %9 = vsyncpa [#allocation6], 0
    %10 = vsyncpa [#allocation4], 0
    // Predicated region
    $region2: #{tpu_custom_call.1} parent=1 // pred_check
      _
    $region3: #{tpu_custom_call.1} parent=1 // pred_check_branch
      %12 = sbr.rel (0) target = $region5
    $region4: #{tpu_custom_call.1} parent=1 // pred_region
      %s14 = ssub.s32 128, 128
      %15 = vsyncadd [#allocation3], %s14
      %s17 = sshll.u32 [#allocation2], 4
      %s18 = int_to_ptr.vmem [resolvable:$true] %s17
      %20 = dma.hbm_to_vmem [thread:$0]  %s0, 128, %s18, [#allocation3]
    $region5: #{tpu_custom_call.1} parent=1 // pred_fallthru
      _
    // Predicated region
    $region6: #{tpu_custom_call.1} parent=1 // pred_check
      _
    $region7: #{tpu_custom_call.1} parent=1 // pred_check_branch
      %22 = sbr.rel (0) target = $region9
    $region8: #{tpu_custom_call.1} parent=1 // pred_region
      %s24 = ssub.s32 128, 128
      %25 = vsyncadd [#allocation6], %s24
      %s27 = sshll.u32 [#allocation5], 4
      %s28 = int_to_ptr.vmem [resolvable:$true] %s27
      %30 = dma.hbm_to_vmem [thread:$0]  %s1, 128, %s28, [#allocation6]
    $region9: #{tpu_custom_call.1} parent=1 // pred_fallthru
      _
    // Predicated region
    $region10: #{tpu_custom_call.1} parent=1 // pred_check
      _
    $region11: #{tpu_custom_call.1} parent=1 // pred_check_branch
      %32 = sbr.rel (0) target = $region13
    $region12: #{tpu_custom_call.1} parent=1 // pred_region
      %s34 = ssub.s32 256, 256
      %35 = vsyncadd [#allocation6], %s34
      %s37 = sshll.u32 [#allocation7], 4
      %s38 = int_to_ptr.vmem [resolvable:$true] %s37
      %40 = dma.hbm_to_vmem [thread:$0]  %s2, 256, %s38, [#allocation6]
    $region13: #{tpu_custom_call.1} parent=1 // pred_fallthru
      _
    // Predicated region
    $region14: #{tpu_custom_call.1} parent=1 // pred_check
      _
    $region15: #{tpu_custom_call.1} parent=1 // pred_check_branch
      %42 = sbr.rel (0) target = $region17
    $region16: #{tpu_custom_call.1} parent=1 // pred_region
      %43 = dma.done [#allocation3], 128
    $region17: #{tpu_custom_call.1} parent=1 // pred_fallthru
      _
    // Predicated region
    $region18: #{tpu_custom_call.1} parent=1 // pred_check
      _
    $region19: #{tpu_custom_call.1} parent=1 // pred_check_branch
      %45 = sbr.rel (0) target = $region21
    $region20: #{tpu_custom_call.1} parent=1 // pred_region
      %46 = dma.done [#allocation6], 128
    $region21: #{tpu_custom_call.1} parent=1 // pred_fallthru
      _
    // Predicated region
    $region22: #{tpu_custom_call.1} parent=1 // pred_check
      _
    $region23: #{tpu_custom_call.1} parent=1 // pred_check_branch
      %48 = sbr.rel (0) target = $region25
    $region24: #{tpu_custom_call.1} parent=1 // pred_region
      %49 = dma.done [#allocation6], 256
    $region25: #{tpu_custom_call.1} parent=1 // pred_fallthru
      _
    %v50 = vld [vmem:[#allocation2] sm:$0xff]
    %v51 = vld [vmem:[#allocation5] sm:$0xff]
    %v52 = vmul.f32 %v50, %v51
    %vm53 = vcmask 261120
    %v54 = vsel %vm53, %v52, 0.0
    %55 = vadd.xlane.f32.xlu0 %v54
    %v56 = vpop.xlane.xlu0 %55
    %v57 = vmin.f32 %v56, 0.0
    %v58 = vand.u32 2147483647, %v56
    %v59 = vsub.f32 0.0, %v58
    %v60 = vmul.f32 %v59, 1.442695
    %v61 = vpow.pop %v60
    %v62 = vadd.f32 %v61, 1.0
    %v63 = vlog2.pop %v62
    %v64 = vmul.f32 %v63, 0.6931472
    %v65 = vmul.f32 -0.5, %v61
    %v66 = vadd.f32 %v65, 1.0
    %v67 = vmul.f32 %v66, %v61
    %v68 = vand.u32 2147483647, %v61
    %vm69 = vcmp.lt.f32.partialorder %v68, 0.0004427343
    %v70 = vsel %vm69, %v67, %v64
    %v71 = vsub.f32 %v57, %v70
    %v72 = vld [vmem:[#allocation7] sm:$0xff]
    %v73 = vmul.f32 %v72, %v50
    %v74 = vsel %vm53, %v73, 0.0
    %75 = vadd.xlane.f32.xlu0 %v74
    %v76 = vpop.xlane.xlu0 %75
    %v77 = vsub.f32 0.0, %v76
    %v78 = vmin.f32 %v77, 0.0
    %v79 = vand.u32 2147483647, %v77
    %v80 = vsub.f32 0.0, %v79
    %v81 = vmul.f32 %v80, 1.442695
    %v82 = vpow.pop %v81
    %v83 = vadd.f32 %v82, 1.0
    %v84 = vlog2.pop %v83
    %v85 = vmul.f32 %v84, 0.6931472
    %v86 = vmul.f32 -0.5, %v82
    %v87 = vadd.f32 %v86, 1.0
    %v88 = vmul.f32 %v87, %v82
    %v89 = vand.u32 2147483647, %v82
    %vm90 = vcmp.lt.f32.partialorder %v89, 0.0004427343
    %v91 = vsel %vm90, %v88, %v85
    %v92 = vsub.f32 %v78, %v91
    %v93 = vadd.f32 %v71, %v92
    %95 = vrot.lane.b32.xlu0 %v50, 32
    %v96 = vpop.permute.xlu0 %95
    %v98 = vmul.f32 %v72, %v96
    %100 = vrot.lane.b32.xlu0 %v98, 96
    %v101 = vpop.permute.xlu0 %100
    %v103 = vsel %vm53, %v101, 0.0
    %104 = vadd.xlane.f32.xlu0 %v103
    %v105 = vpop.xlane.xlu0 %104
    %v106 = vsub.f32 0.0, %v105
    %v107 = vmin.f32 %v106, 0.0
    %v108 = vand.u32 2147483647, %v106
    %v109 = vsub.f32 0.0, %v108
    %v110 = vmul.f32 %v109, 1.442695
    %v111 = vpow.pop %v110
    %v112 = vadd.f32 %v111, 1.0
    %v113 = vlog2.pop %v112
    %v114 = vmul.f32 %v113, 0.6931472
    %v115 = vmul.f32 -0.5, %v111
    %v116 = vadd.f32 %v115, 1.0
    %v117 = vmul.f32 %v116, %v111
    %v118 = vand.u32 2147483647, %v111
    %vm119 = vcmp.lt.f32.partialorder %v118, 0.0004427343
    %v120 = vsel %vm119, %v117, %v114
    %v121 = vsub.f32 %v107, %v120
    %v122 = vadd.f32 %v93, %v121
    %123 = vrot.lane.b32.xlu0 %v50, 64
    %v124 = vpop.permute.xlu0 %123
    %v126 = vmul.f32 %v72, %v124
    %128 = vrot.lane.b32.xlu0 %v126, 64
    %v129 = vpop.permute.xlu0 %128
    %v131 = vsel %vm53, %v129, 0.0
    %132 = vadd.xlane.f32.xlu0 %v131
    %v133 = vpop.xlane.xlu0 %132
    %v134 = vsub.f32 0.0, %v133
    %v135 = vmin.f32 %v134, 0.0
    %v136 = vand.u32 2147483647, %v134
    %v137 = vsub.f32 0.0, %v136
    %v138 = vmul.f32 %v137, 1.442695
    %v139 = vpow.pop %v138
    %v140 = vadd.f32 %v139, 1.0
    %v141 = vlog2.pop %v140
    %v142 = vmul.f32 %v141, 0.6931472
    %v143 = vmul.f32 -0.5, %v139
    %v144 = vadd.f32 %v143, 1.0
    %v145 = vmul.f32 %v144, %v139
    %v146 = vand.u32 2147483647, %v139
    %vm147 = vcmp.lt.f32.partialorder %v146, 0.0004427343
    %v148 = vsel %vm147, %v145, %v142
    %v149 = vsub.f32 %v135, %v148
    %v150 = vadd.f32 %v122, %v149
    %151 = vrot.lane.b32.xlu0 %v50, 96
    %v152 = vpop.permute.xlu0 %151
    %v154 = vmul.f32 %v72, %v152
    %156 = vrot.lane.b32.xlu0 %v154, 32
    %v157 = vpop.permute.xlu0 %156
    %v159 = vsel %vm53, %v157, 0.0
    %160 = vadd.xlane.f32.xlu0 %v159
    %v161 = vpop.xlane.xlu0 %160
    %v162 = vsub.f32 0.0, %v161
    %v163 = vmin.f32 %v162, 0.0
    %v164 = vand.u32 2147483647, %v162
    %v165 = vsub.f32 0.0, %v164
    %v166 = vmul.f32 %v165, 1.442695
    %v167 = vpow.pop %v166
    %v168 = vadd.f32 %v167, 1.0
    %v169 = vlog2.pop %v168
    %v170 = vmul.f32 %v169, 0.6931472
    %v171 = vmul.f32 -0.5, %v167
    %v172 = vadd.f32 %v171, 1.0
    %v173 = vmul.f32 %v172, %v167
    %v174 = vand.u32 2147483647, %v167
    %vm175 = vcmp.lt.f32.partialorder %v174, 0.0004427343
    %v176 = vsel %vm175, %v173, %v170
    %v177 = vsub.f32 %v163, %v176
    %v178 = vadd.f32 %v150, %v177
    %v179 = vld [vmem:[#allocation7 + $0x8] sm:$0xff]
    %v180 = vmul.f32 %v179, %v50
    %v181 = vsel %vm53, %v180, 0.0
    %182 = vadd.xlane.f32.xlu0 %v181
    %v183 = vpop.xlane.xlu0 %182
    %v184 = vsub.f32 0.0, %v183
    %v185 = vmin.f32 %v184, 0.0
    %v186 = vand.u32 2147483647, %v184
    %v187 = vsub.f32 0.0, %v186
    %v188 = vmul.f32 %v187, 1.442695
    %v189 = vpow.pop %v188
    %v190 = vadd.f32 %v189, 1.0
    %v191 = vlog2.pop %v190
    %v192 = vmul.f32 %v191, 0.6931472
    %v193 = vmul.f32 -0.5, %v189
    %v194 = vadd.f32 %v193, 1.0
    %v195 = vmul.f32 %v194, %v189
    %v196 = vand.u32 2147483647, %v189
    %vm197 = vcmp.lt.f32.partialorder %v196, 0.0004427343
    %v198 = vsel %vm197, %v195, %v192
    %v199 = vsub.f32 %v185, %v198
    %v200 = vadd.f32 %v178, %v199
    %v201 = vmul.f32 %v179, %v96
    %203 = vrot.lane.b32.xlu0 %v201, 96
    %v204 = vpop.permute.xlu0 %203
    %v206 = vsel %vm53, %v204, 0.0
    %207 = vadd.xlane.f32.xlu0 %v206
    %v208 = vpop.xlane.xlu0 %207
    %v209 = vsub.f32 0.0, %v208
    %v210 = vmin.f32 %v209, 0.0
    %v211 = vand.u32 2147483647, %v209
    %v212 = vsub.f32 0.0, %v211
    %v213 = vmul.f32 %v212, 1.442695
    %v214 = vpow.pop %v213
    %v215 = vadd.f32 %v214, 1.0
    %v216 = vlog2.pop %v215
    %v217 = vmul.f32 %v216, 0.6931472
    %v218 = vmul.f32 -0.5, %v214
    %v219 = vadd.f32 %v218, 1.0
    %v220 = vmul.f32 %v219, %v214
    %v221 = vand.u32 2147483647, %v214
    %vm222 = vcmp.lt.f32.partialorder %v221, 0.0004427343
    %v223 = vsel %vm222, %v220, %v217
    %v224 = vsub.f32 %v210, %v223
    %v225 = vadd.f32 %v200, %v224
    %v226 = vmul.f32 %v179, %v124
    %228 = vrot.lane.b32.xlu0 %v226, 64
    %v229 = vpop.permute.xlu0 %228
    %v231 = vsel %vm53, %v229, 0.0
    %232 = vadd.xlane.f32.xlu0 %v231
    %v233 = vpop.xlane.xlu0 %232
    %v234 = vsub.f32 0.0, %v233
    %v235 = vmin.f32 %v234, 0.0
    %v236 = vand.u32 2147483647, %v234
    %v237 = vsub.f32 0.0, %v236
    %v238 = vmul.f32 %v237, 1.442695
    %v239 = vpow.pop %v238
    %v240 = vadd.f32 %v239, 1.0
    %v241 = vlog2.pop %v240
    %v242 = vmul.f32 %v241, 0.6931472
    %v243 = vmul.f32 -0.5, %v239
    %v244 = vadd.f32 %v243, 1.0
    %v245 = vmul.f32 %v244, %v239
    %v246 = vand.u32 2147483647, %v239
    %vm247 = vcmp.lt.f32.partialorder %v246, 0.0004427343
    %v248 = vsel %vm247, %v245, %v242
    %v249 = vsub.f32 %v235, %v248
    %v250 = vadd.f32 %v225, %v249
    %v251 = vmul.f32 %v179, %v152
    %253 = vrot.lane.b32.xlu0 %v251, 32
    %v254 = vpop.permute.xlu0 %253
    %v256 = vsel %vm53, %v254, 0.0
    %257 = vadd.xlane.f32.xlu0 %v256
    %v258 = vpop.xlane.xlu0 %257
    %v259 = vsub.f32 0.0, %v258
    %v260 = vmin.f32 %v259, 0.0
    %v261 = vand.u32 2147483647, %v259
    %v262 = vsub.f32 0.0, %v261
    %v263 = vmul.f32 %v262, 1.442695
    %v264 = vpow.pop %v263
    %v265 = vadd.f32 %v264, 1.0
    %v266 = vlog2.pop %v265
    %v267 = vmul.f32 %v266, 0.6931472
    %v268 = vmul.f32 -0.5, %v264
    %v269 = vadd.f32 %v268, 1.0
    %v270 = vmul.f32 %v269, %v264
    %v271 = vand.u32 2147483647, %v264
    %vm272 = vcmp.lt.f32.partialorder %v271, 0.0004427343
    %v273 = vsel %vm272, %v270, %v267
    %v274 = vsub.f32 %v260, %v273
    %v275 = vadd.f32 %v250, %v274
    %v276 = vlaneseq
    %v277 = vshrl.u32 %v276, 7
    %s278 = smul.u32 0, 8
    %v279 = vstv %s278
    %v280 = vadd.s32 %v277, %v279
    %vm281 = vcmp.lt.s32.totalorder %v280, 8
    %v282 = vsel %vm281, %v275, 0.0
    %vm283 = vcmask 7168
    %v284 = vsel %vm283, %v282, 0.0
    %285 = vadd.xlane.f32.xlu0 %v284
    %v286 = vpop.xlane.xlu0 %285
    %v287 = vrot.slane %v286, 4
    %v288 = vadd.f32 %v286, %v287
    %v289 = vrot.slane %v288, 2
    %v290 = vadd.f32 %v288, %v289
    %v291 = vrot.slane %v290, 1
    %v292 = vadd.f32 %v290, %v291
    %s293 = vtos %v292
    %v294 = vstv %s293
    %295 = vst [vmem:[#allocation8] sm:$0xff] %v294
    // Predicated region
    $region26: #{tpu_custom_call.1} parent=1 // pred_check
      _
    $region27: #{tpu_custom_call.1} parent=1 // pred_check_branch
      %297 = sbr.rel (0) target = $region29
    $region28: #{tpu_custom_call.1} parent=1 // pred_region
      %s299 = ssub.s32 128, 128
      %300 = vsyncadd [#allocation4], %s299
      %s302 = sshll.u32 [#allocation8], 4
      %s303 = int_to_ptr.vmem [resolvable:$true] %s302
      %305 = dma.vmem_to_hbm [thread:$0]  %s303, 128, %s3, [#allocation4]
    $region29: #{tpu_custom_call.1} parent=1 // pred_fallthru
      _
    // Predicated region
    $region30: #{tpu_custom_call.1} parent=1 // pred_check
      _
    $region31: #{tpu_custom_call.1} parent=1 // pred_check_branch
      %307 = sbr.rel (0) target = $region33
    $region32: #{tpu_custom_call.1} parent=1 // pred_region
      %308 = dma.done [#allocation4], 128
    $region33: #{tpu_custom_call.1} parent=1 // pred_fallthru
      _
    %309 = vsyncpa [#allocation3], 1
    %310 = vsyncpa [#allocation6], 1
    %311 = vsyncpa [#allocation4], 1

</llo_original>
